<compile_context>
chip_gen: v5e
topology: v5e:2x2
jax: 0.10.0
libtpu: 0.0.40
codegen_flags: <defaults>
</compile_context>

<pallas_src>
import functools

import jax
import jax.numpy as jnp
from jax import lax
from jax.experimental import pallas as pl
from jax.experimental.pallas import tpu as pltpu


def convbn_kernel(x_ref, m_ref, p_ref, memb_ref, expand_ref, gamma_ref, beta_ref,
                  o_ref, *, eps, H, bm):
    """One grid step = bm row-folded x bs lane-folded samples, folded (rows, lanes) layout.

    x_ref      : (1, bm*H, Li)   activations, Li = bs*W*Cin lanes
    m_ref      : (3, Li, Lo)     banded block-diagonal conv weights, one per H-tap
    p_ref      : (Lo, Lo)        memb @ expand  (group mean fold + broadcast in one dot)
    memb_ref   : (Lo, bs*G)      lane -> group membership * 1/(H*W*Cg)
    expand_ref : (bs*G, Lo)      group -> lane one-hot expansion
    gamma_ref  : (1, Lo)         GN scale, lane-tiled
    beta_ref   : (1, Lo)         GN shift, lane-tiled
    o_ref      : (1, bm*H, Lo)   output tile (Lo = bs*W*Cout lanes, >=128 when possible)
    """
    x = x_ref[0]                                       # (rows, Li)
    rows = x.shape[0]

    # ---- 3x3 'SAME' conv: H taps via XLU rolls + boundary masks; W taps and the W
    #      zero-padding are folded into the banded weights -> 3 lane-dense MXU matmuls.
    h = lax.broadcasted_iota(jnp.int32, (rows, 1), 0)
    if bm > 1:
        h = h % H                                      # per-sample row index (halo mask)
    x_up = jnp.where(h == 0, 0.0, pltpu.roll(x, 1, axis=0))            # x[h-1]
    x_dn = jnp.where(h == H - 1, 0.0, pltpu.roll(x, rows - 1, axis=0))  # x[h+1]

    y = jnp.dot(x_up, m_ref[0], preferred_element_type=jnp.float32)
    y = y + jnp.dot(x, m_ref[1], preferred_element_type=jnp.float32)
    y = y + jnp.dot(x_dn, m_ref[2], preferred_element_type=jnp.float32)  # (rows, Lo) f32

    gam = gamma_ref[...]
    bet = beta_ref[...]

    if bm == 1:
        # ---- GroupNorm (two-pass variance, biased, matching PyTorch) ----
        colsum = jnp.sum(y, axis=0, keepdims=True)                              # (1, Lo)
        mean_l = jnp.dot(colsum, p_ref[...], preferred_element_type=jnp.float32)
        centered = y - mean_l
        sqsum = jnp.sum(centered * centered, axis=0, keepdims=True)             # (1, Lo)
        var_g = jnp.dot(sqsum, memb_ref[...], preferred_element_type=jnp.float32)
        inv_g = lax.rsqrt(jnp.maximum(var_g, 0.0) + eps)                        # EUP
        inv_l = jnp.dot(inv_g, expand_ref[...], preferred_element_type=jnp.float32)
        o_ref[0] = centered * (inv_l * gam) + bet
    else:
        # ---- per-sample stats over the (bm, H, Lo) view (row-folded samples) ----
        y3 = y.reshape(bm, H, -1)
        colsum = jnp.sum(y3, axis=1)                                            # (bm, Lo)
        mean_l = jnp.dot(colsum, p_ref[...], preferred_element_type=jnp.float32)
        centered = y3 - mean_l[:, None, :]
        sqsum = jnp.sum(centered * centered, axis=1)                            # (bm, Lo)
        var_g = jnp.dot(sqsum, memb_ref[...], preferred_element_type=jnp.float32)
        inv_g = lax.rsqrt(jnp.maximum(var_g, 0.0) + eps)
        inv_l = jnp.dot(inv_g, expand_ref[...], preferred_element_type=jnp.float32)
        out = centered * (inv_l * gam)[:, None, :] + bet
        o_ref[0] = out.reshape(rows, -1)


def _choose_fold(N, H, W, Cout):
    """Pick (bs, bm): samples folded into lanes / into MXU rows per grid step."""
    # Lane fold: smallest divisor of N that makes the output tile >= 128 lanes
    # (lane-dense stores, full MXU columns).
    bs = 1
    for d in range(1, N + 1):
        if N % d == 0:
            bs = d
            if d * W * Cout >= 128:
                break
    # Row fold: fill MXU rows up to ~256 (v6e/v7x MXU height) while keeping the
    # batch grid length >= 2 when the remaining batch allows (v7x megacore balance).
    rem = N // bs
    bm = 1
    for d in range(1, rem + 1):
        if rem % d == 0 and d * H <= 256 and (rem < 2 or rem // d >= 2):
            bm = d
    return bs, bm


def make_conv_bn(weight, gamma, beta, *, in_shape, gn_group=4, eps=1e-5,
                 mxu_dtype=jnp.float32):
    """Build all parameter-only constants once; return a jitted apply(x_nchw).

    weight : (Cout, Cin, 3, 3),  gamma/beta : (Cout,),  in_shape : (N, Cin, H, W)
    mxu_dtype=jnp.bfloat16 is recommended on v6e/v7x (GN math stays f32).
    """
    N, Cin, H, W = in_shape
    Cout = weight.shape[0]
    assert weight.shape == (Cout, Cin, 3, 3), "only kernel_size=3, stride=1, pad=1"
    assert Cout % gn_group == 0
    G, Cg = gn_group, Cout // gn_group
    f32 = jnp.float32

    bs, bm = _choose_fold(N, H, W, Cout)
    grid = N // (bs * bm)
    WCi, WCo = W * Cin, W * Cout
    Li, Lo = bs * WCi, bs * WCo
    rows = bm * H

    # ---- banded conv weights (built once): the 3 W-taps + W zero-padding become
    #      bands of a (WCi, WCo) matrix; bs lane-folded samples -> block diagonal.
    wt = jnp.transpose(weight.astype(f32), (2, 3, 1, 0))            # (dy, dx, Cin, Cout)
    wi = jnp.arange(W)[:, None]
    wo = jnp.arange(W)[None, :]
    dxi = wi - wo + 1                                                # (W, W)
    valid = (dxi >= 0) & (dxi <= 2)
    m1 = wt[:, jnp.clip(dxi, 0, 2)]                                  # (3, W, W, Cin, Cout)
    m1 = jnp.where(valid[None, :, :, None, None], m1, 0.0)
    m1 = jnp.transpose(m1, (0, 1, 3, 2, 4)).reshape(3, WCi, WCo)
    eye_bs = jnp.eye(bs, dtype=f32)
    m = jnp.stack([jnp.kron(eye_bs, m1[d]) for d in range(3)]).astype(mxu_dtype)

    # ---- GroupNorm helpers in the folded lane layout (per lane-folded sample) ----
    lane = jnp.arange(Lo)
    grp = (lane // WCo) * G + ((lane % WCo) % Cout) // Cg            # lane -> (sample, group)
    onehot = jax.nn.one_hot(grp, bs * G, dtype=f32)                  # (Lo, bs*G)
    memb = onehot / float(H * W * Cg)
    expand = onehot.T
    P = memb @ expand                                                # (Lo, Lo)
    gamma_l = jnp.tile(gamma.astype(f32), bs * W).reshape(1, Lo)
    beta_l = jnp.tile(beta.astype(f32), bs * W).reshape(1, Lo)

    kernel = functools.partial(convbn_kernel, eps=eps, H=H, bm=bm)

    call = pl.pallas_call(
        kernel,
        out_shape=jax.ShapeDtypeStruct((grid, rows, Lo), f32),
        grid=(grid,),
        in_specs=[
            pl.BlockSpec((1, rows, Li), lambda n: (n, 0, 0)),   # activations (per grid step)
            pl.BlockSpec((3, Li, Lo), lambda n: (0, 0, 0)),     # banded weights (resident)
            pl.BlockSpec((Lo, Lo), lambda n: (0, 0)),           # P = memb @ expand
            pl.BlockSpec((Lo, bs * G), lambda n: (0, 0)),       # group membership
            pl.BlockSpec((bs * G, Lo), lambda n: (0, 0)),       # group expansion
            pl.BlockSpec((1, Lo), lambda n: (0, 0)),            # gamma (lane-tiled)
            pl.BlockSpec((1, Lo), lambda n: (0, 0)),            # beta  (lane-tiled)
        ],
        out_specs=pl.BlockSpec((1, rows, Lo), lambda n: (n, 0, 0)),
        compiler_params=pltpu.CompilerParams(
            dimension_semantics=("parallel",),        # megacore split of the batch grid
            vmem_limit_bytes=32 * 1024 * 1024,        # explicit, well under v7x 64 MiB physical
        ),
    )

    @jax.jit
    def apply(x_nchw):
        # NCHW -> folded (grid, bm*H, bs*W*Cin).  TODO(synk): take channels-last input.
        x_t = jnp.transpose(x_nchw, (0, 2, 3, 1)).reshape(N, H, WCi).astype(mxu_dtype)
        x_t = x_t.reshape(grid, bm, bs, H, WCi)
        x_t = jnp.transpose(x_t, (0, 1, 3, 2, 4)).reshape(grid, rows, Li)
        out_f = call(x_t, m, P, memb, expand, gamma_l, beta_l)
        o = out_f.reshape(grid, bm, H, bs, W, Cout)
        o = jnp.transpose(o, (0, 1, 3, 5, 2, 4)).reshape(N, Cout, H, W)
        return o

    return apply


def conv_bn(x_nchw, weight, gamma, beta, *, gn_group=4, eps=1e-5,
            mxu_dtype=jnp.float32):
    """One-shot convenience wrapper (rebuilds constants every call; prefer make_conv_bn)."""
    return make_conv_bn(weight, gamma, beta, in_shape=x_nchw.shape,
                        gn_group=gn_group, eps=eps, mxu_dtype=mxu_dtype)(x_nchw)


# ---------------- pure-JAX reference (correctness smoke test) ----------------
def _ref_conv_bn(x, w, gamma, beta, G, eps):
    y = lax.conv_general_dilated(
        x, w, window_strides=(1, 1), padding=((1, 1), (1, 1)),
        dimension_numbers=("NCHW", "OIHW", "NCHW"))
    N, C, H, W = y.shape
    yg = y.reshape(N, G, -1)
    mean = yg.mean(-1, keepdims=True)
    var = yg.var(-1, keepdims=True)
    yn = ((yg - mean) * lax.rsqrt(var + eps)).reshape(N, C, H, W)
    return yn * gamma[None, :, None, None] + beta[None, :, None, None]


if __name__ == "__main__":
    N, Cin, Cout, H, W = 2, 4, 4, 16, 16   # ConvBn(4, 4) on a (2, 4, 16, 16) input
    key = jax.random.PRNGKey(0)
    kx, kw, kg, kb = jax.random.split(key, 4)

    x = jax.random.normal(kx, (N, Cin, H, W), jnp.float32)
    w = jax.random.normal(kw, (Cout, Cin, 3, 3), jnp.float32) * 0.2
    gamma = 1.0 + 0.1 * jax.random.normal(kg, (Cout,), jnp.float32)
    beta = 0.1 * jax.random.normal(kb, (Cout,), jnp.float32)

    # Constants (banded weights, GN helpers) are built exactly once here; apply()
    # only relayouts the activations and runs the fused Pallas kernel.
    apply = make_conv_bn(w, gamma, beta, in_shape=x.shape, gn_group=4, eps=1e-5)
    out = jax.block_until_ready(apply(x))
    ref = _ref_conv_bn(x, w, gamma, beta, G=4, eps=1e-5)

    assert out.shape == (N, Cout, H, W)
    max_err = float(jnp.max(jnp.abs(out - ref)))
    assert jnp.allclose(out, ref, rtol=1e-2, atol=1e-2), f"max abs err = {max_err}"

    print("KERNEL_OK")
</pallas_src>

<mosaic_0001>
module attributes {stable_mosaic.version = 11 : i64} {
  func.func @convbn_kernel(%arg0: i32, %arg1: memref<1x16x128xf32, #tpu.memory_space<vmem>>, %arg2: memref<3x128x128xf32, #tpu.memory_space<vmem>>, %arg3: memref<128x128xf32, #tpu.memory_space<vmem>>, %arg4: memref<128x8xf32, #tpu.memory_space<vmem>>, %arg5: memref<8x128xf32, #tpu.memory_space<vmem>>, %arg6: memref<1x128xf32, #tpu.memory_space<vmem>>, %arg7: memref<1x128xf32, #tpu.memory_space<vmem>>, %arg8: memref<1x16x128xf32, #tpu.memory_space<vmem>>) attributes {dimension_semantics = [#tpu.dimension_semantics<parallel>], iteration_bounds = array<i64: 1>, scalar_prefetch = 0 : i64, scratch_operands = 0 : i64, tpu.core_type = #tpu.core_type<tc>, window_params = [{transform_indices = @transform_0, window_bounds = array<i64: 1, 16, 128>}, {pipeline_mode = #tpu.pipeline_mode<synchronous>, transform_indices = @transform_1, window_bounds = array<i64: 3, 128, 128>}, {pipeline_mode = #tpu.pipeline_mode<synchronous>, transform_indices = @transform_2, window_bounds = array<i64: 128, 128>}, {pipeline_mode = #tpu.pipeline_mode<synchronous>, transform_indices = @transform_3, window_bounds = array<i64: 128, 8>}, {pipeline_mode = #tpu.pipeline_mode<synchronous>, transform_indices = @transform_4, window_bounds = array<i64: 8, 128>}, {pipeline_mode = #tpu.pipeline_mode<synchronous>, transform_indices = @transform_5, window_bounds = array<i64: 1, 128>}, {pipeline_mode = #tpu.pipeline_mode<synchronous>, transform_indices = @transform_6, window_bounds = array<i64: 1, 128>}, {transform_indices = @transform_7, window_bounds = array<i64: 1, 16, 128>}]} {
    %c0 = arith.constant 0 : index
    %c0_0 = arith.constant 0 : index
    %c0_1 = arith.constant 0 : index
    %0 = vector.load %arg1[%c0, %c0_0, %c0_1] : memref<1x16x128xf32, #tpu.memory_space<vmem>>, vector<1x16x128xf32>
    %1 = vector.shape_cast %0 : vector<1x16x128xf32> to vector<16x128xf32>
    %2 = tpu.iota {dimensions = array<i32: 0>} : vector<16x1xi32>
    %c0_i32 = arith.constant 0 : i32
    %3 = vector.broadcast %c0_i32 : i32 to vector<16x1xi32>
    %4 = arith.cmpi eq, %2, %3 : vector<16x1xi32>
    %c1_i32 = arith.constant 1 : i32
    %5 = tpu.dynamic_rotate %1 by %c1_i32 dim 0 : vector<16x128xf32>, i32 -> vector<16x128xf32>
    %cst = arith.constant 0.000000e+00 : f32
    %6 = vector.shape_cast %4 : vector<16x1xi1> to vector<16x1xi1>
    %7 = vector.broadcast %6 : vector<16x1xi1> to vector<16x128xi1>
    %8 = vector.broadcast %cst : f32 to vector<16x128xf32>
    %9 = arith.select %7, %8, %5 : vector<16x128xi1>, vector<16x128xf32>
    %c15_i32 = arith.constant 15 : i32
    %10 = vector.broadcast %c15_i32 : i32 to vector<16x1xi32>
    %11 = arith.cmpi eq, %2, %10 : vector<16x1xi32>
    %c15_i32_2 = arith.constant 15 : i32
    %12 = tpu.dynamic_rotate %1 by %c15_i32_2 dim 0 : vector<16x128xf32>, i32 -> vector<16x128xf32>
    %cst_3 = arith.constant 0.000000e+00 : f32
    %13 = vector.shape_cast %11 : vector<16x1xi1> to vector<16x1xi1>
    %14 = vector.broadcast %13 : vector<16x1xi1> to vector<16x128xi1>
    %15 = vector.broadcast %cst_3 : f32 to vector<16x128xf32>
    %16 = arith.select %14, %15, %12 : vector<16x128xi1>, vector<16x128xf32>
    %c0_4 = arith.constant 0 : index
    %c0_5 = arith.constant 0 : index
    %c0_6 = arith.constant 0 : index
    %17 = vector.load %arg2[%c0_4, %c0_5, %c0_6] : memref<3x128x128xf32, #tpu.memory_space<vmem>>, vector<1x128x128xf32>
    %18 = vector.shape_cast %17 : vector<1x128x128xf32> to vector<128x128xf32>
    %cst_7 = arith.constant dense<0.000000e+00> : vector<16x128xf32>
    %19 = tpu.matmul %9, %18, %cst_7 {dimension_numbers = #tpu.dot_dimension_numbers<[1], [0], [0], [1], [0, 0, 1, 1], [], []>} : vector<16x128xf32>, vector<128x128xf32>, vector<16x128xf32> -> vector<16x128xf32>
    %c1 = arith.constant 1 : index
    %c0_8 = arith.constant 0 : index
    %c0_9 = arith.constant 0 : index
    %20 = vector.load %arg2[%c1, %c0_8, %c0_9] : memref<3x128x128xf32, #tpu.memory_space<vmem>>, vector<1x128x128xf32>
    %21 = vector.shape_cast %20 : vector<1x128x128xf32> to vector<128x128xf32>
    %cst_10 = arith.constant dense<0.000000e+00> : vector<16x128xf32>
    %22 = tpu.matmul %1, %21, %cst_10 {dimension_numbers = #tpu.dot_dimension_numbers<[1], [0], [0], [1], [0, 0, 1, 1], [], []>} : vector<16x128xf32>, vector<128x128xf32>, vector<16x128xf32> -> vector<16x128xf32>
    %23 = arith.addf %19, %22 : vector<16x128xf32>
    %c2 = arith.constant 2 : index
    %c0_11 = arith.constant 0 : index
    %c0_12 = arith.constant 0 : index
    %24 = vector.load %arg2[%c2, %c0_11, %c0_12] : memref<3x128x128xf32, #tpu.memory_space<vmem>>, vector<1x128x128xf32>
    %25 = vector.shape_cast %24 : vector<1x128x128xf32> to vector<128x128xf32>
    %cst_13 = arith.constant dense<0.000000e+00> : vector<16x128xf32>
    %26 = tpu.matmul %16, %25, %cst_13 {dimension_numbers = #tpu.dot_dimension_numbers<[1], [0], [0], [1], [0, 0, 1, 1], [], []>} : vector<16x128xf32>, vector<128x128xf32>, vector<16x128xf32> -> vector<16x128xf32>
    %27 = arith.addf %23, %26 : vector<16x128xf32>
    %c0_14 = arith.constant 0 : index
    %c0_15 = arith.constant 0 : index
    %28 = vector.load %arg6[%c0_14, %c0_15] : memref<1x128xf32, #tpu.memory_space<vmem>>, vector<1x128xf32>
    %c0_16 = arith.constant 0 : index
    %c0_17 = arith.constant 0 : index
    %29 = vector.load %arg7[%c0_16, %c0_17] : memref<1x128xf32, #tpu.memory_space<vmem>>, vector<1x128xf32>
    %cst_18 = arith.constant dense<0.000000e+00> : vector<128xf32>
    %30 = vector.multi_reduction <add>, %27, %cst_18 [0] : vector<16x128xf32> to vector<128xf32>
    %31 = vector.shape_cast %30 : vector<128xf32> to vector<1x128xf32>
    %c0_19 = arith.constant 0 : index
    %c0_20 = arith.constant 0 : index
    %32 = vector.load %arg3[%c0_19, %c0_20] : memref<128x128xf32, #tpu.memory_space<vmem>>, vector<128x128xf32>
    %cst_21 = arith.constant dense<0.000000e+00> : vector<1x128xf32>
    %33 = tpu.matmul %31, %32, %cst_21 {dimension_numbers = #tpu.dot_dimension_numbers<[1], [0], [0], [1], [0, 0, 1, 1], [], []>} : vector<1x128xf32>, vector<128x128xf32>, vector<1x128xf32> -> vector<1x128xf32>
    %34 = vector.broadcast %33 : vector<1x128xf32> to vector<16x128xf32>
    %35 = arith.subf %27, %34 : vector<16x128xf32>
    %36 = arith.mulf %35, %35 : vector<16x128xf32>
    %cst_22 = arith.constant dense<0.000000e+00> : vector<128xf32>
    %37 = vector.multi_reduction <add>, %36, %cst_22 [0] : vector<16x128xf32> to vector<128xf32>
    %38 = vector.shape_cast %37 : vector<128xf32> to vector<1x128xf32>
    %c0_23 = arith.constant 0 : index
    %c0_24 = arith.constant 0 : index
    %39 = vector.load %arg4[%c0_23, %c0_24] : memref<128x8xf32, #tpu.memory_space<vmem>>, vector<128x8xf32>
    %cst_25 = arith.constant dense<0.000000e+00> : vector<1x8xf32>
    %40 = tpu.matmul %38, %39, %cst_25 {dimension_numbers = #tpu.dot_dimension_numbers<[1], [0], [0], [1], [0, 0, 1, 1], [], []>} : vector<1x128xf32>, vector<128x8xf32>, vector<1x8xf32> -> vector<1x8xf32>
    %cst_26 = arith.constant 0.000000e+00 : f32
    %41 = vector.broadcast %cst_26 : f32 to vector<1x8xf32>
    %42 = arith.maximumf %40, %41 : vector<1x8xf32>
    %cst_27 = arith.constant 9.99999974E-6 : f32
    %43 = vector.broadcast %cst_27 : f32 to vector<1x8xf32>
    %44 = arith.addf %42, %43 : vector<1x8xf32>
    %45 = math.rsqrt %44 : vector<1x8xf32>
    %c0_28 = arith.constant 0 : index
    %c0_29 = arith.constant 0 : index
    %46 = vector.load %arg5[%c0_28, %c0_29] : memref<8x128xf32, #tpu.memory_space<vmem>>, vector<8x128xf32>
    %cst_30 = arith.constant dense<0.000000e+00> : vector<1x128xf32>
    %47 = tpu.matmul %45, %46, %cst_30 {dimension_numbers = #tpu.dot_dimension_numbers<[1], [0], [0], [1], [0, 0, 1, 1], [], []>} : vector<1x8xf32>, vector<8x128xf32>, vector<1x128xf32> -> vector<1x128xf32>
    %48 = arith.mulf %47, %28 : vector<1x128xf32>
    %49 = vector.broadcast %48 : vector<1x128xf32> to vector<16x128xf32>
    %50 = arith.mulf %35, %49 : vector<16x128xf32>
    %51 = vector.broadcast %29 : vector<1x128xf32> to vector<16x128xf32>
    %52 = arith.addf %50, %51 : vector<16x128xf32>
    %c0_31 = arith.constant 0 : index
    %c0_32 = arith.constant 0 : index
    %c0_33 = arith.constant 0 : index
    %53 = vector.load %arg8[%c0_31, %c0_32, %c0_33] : memref<1x16x128xf32, #tpu.memory_space<vmem>>, vector<1x16x128xf32>
    %54 = vector.shape_cast %53 : vector<1x16x128xf32> to vector<16x128xf32>
    %55 = vector.shape_cast %52 : vector<16x128xf32> to vector<1x16x128xf32>
    tpu.vector_store %arg8[%c0_31, %c0_32, %c0_33], %55 {strides = array<i32>} : memref<1x16x128xf32, #tpu.memory_space<vmem>>, vector<1x16x128xf32>,
    return
  }
  func.func @transform_0(%arg0: i32) -> (i32, i32, i32) {
    %c0_i32 = arith.constant 0 : i32
    %c0_i32_0 = arith.constant 0 : i32
    %c0_i32_1 = arith.constant 0 : i32
    return %arg0, %c0_i32, %c0_i32_0 : i32, i32, i32
  }
  func.func @transform_1(%arg0: i32) -> (i32, i32, i32) {
    %c0_i32 = arith.constant 0 : i32
    %c0_i32_0 = arith.constant 0 : i32
    %c0_i32_1 = arith.constant 0 : i32
    %c0_i32_2 = arith.constant 0 : i32
    return %c0_i32, %c0_i32_0, %c0_i32_1 : i32, i32, i32
  }
  func.func @transform_2(%arg0: i32) -> (i32, i32) {
    %c0_i32 = arith.constant 0 : i32
    %c0_i32_0 = arith.constant 0 : i32
    %c0_i32_1 = arith.constant 0 : i32
    return %c0_i32, %c0_i32_0 : i32, i32
  }
  func.func @transform_3(%arg0: i32) -> (i32, i32) {
    %c0_i32 = arith.constant 0 : i32
    %c0_i32_0 = arith.constant 0 : i32
    %c0_i32_1 = arith.constant 0 : i32
    return %c0_i32, %c0_i32_0 : i32, i32
  }
  func.func @transform_4(%arg0: i32) -> (i32, i32) {
    %c0_i32 = arith.constant 0 : i32
    %c0_i32_0 = arith.constant 0 : i32
    %c0_i32_1 = arith.constant 0 : i32
    return %c0_i32, %c0_i32_0 : i32, i32
  }
  func.func @transform_5(%arg0: i32) -> (i32, i32) {
    %c0_i32 = arith.constant 0 : i32
    %c0_i32_0 = arith.constant 0 : i32
    %c0_i32_1 = arith.constant 0 : i32
    return %c0_i32, %c0_i32_0 : i32, i32
  }
  func.func @transform_6(%arg0: i32) -> (i32, i32) {
    %c0_i32 = arith.constant 0 : i32
    %c0_i32_0 = arith.constant 0 : i32
    %c0_i32_1 = arith.constant 0 : i32
    return %c0_i32, %c0_i32_0 : i32, i32
  }
  func.func @transform_7(%arg0: i32) -> (i32, i32, i32) {
    %c0_i32 = arith.constant 0 : i32
    %c0_i32_0 = arith.constant 0 : i32
    %c0_i32_1 = arith.constant 0 : i32
    return %arg0, %c0_i32, %c0_i32_0 : i32, i32, i32
  }
}

</mosaic_0001>

<llo_original>
// kernel: apply.1
$region0: #{apply.1}
  #allocation0 [shape = 'u32[]', space=smem, size = 0x4, offset = 0x4, fixed_abs, tag = 'smem constant byte address 0x4 - core index']
  #allocation1 [shape = 'u32[72,128]{1,0:T(1,128)}', space=vmem, size = 0x9000, scoped, tag = 'internal scratch']
  %s0 = inlined_call_operand.vmem [shape: f32[1,16,128], index: 0, kind: input, shape index: {}]
  %s1 = inlined_call_operand.vmem [shape: f32[3,128,128], index: 1, kind: input, shape index: {}]
  %s2 = inlined_call_operand.hbm [shape: f32[128,128], index: 2, kind: input, shape index: {}]
  %s3 = inlined_call_operand.hbm [shape: f32[128,8], index: 3, kind: input, shape index: {}]
  %s4 = inlined_call_operand.vmem [shape: f32[8,128], index: 4, kind: input, shape index: {}]
  %s5 = inlined_call_operand.vmem [shape: f32[1,128], index: 5, kind: input, shape index: {}]
  %s6 = inlined_call_operand.vmem [shape: f32[1,128], index: 6, kind: input, shape index: {}]
  %s7 = inlined_call_operand.vmem [shape: f32[1,16,128], index: 7, kind: output, shape index: {}]
  %s8 = sld [smem:[#allocation0]]
  $region46: #{apply.1} parent=0
    _
  %s10 = ssub.s32 1, %s8
  %s11 = scalar_select 0, %s10, %s8
  $region1: #{apply.1} parent=0
    #allocation2 [shape = 'u8[65536]{0}', space=vmem, size = 0x10000, scoped, tag = 'input window, operand 2, single buffered']
    #allocation3 [shape = 's32[1]{0}', space=sflag, size = 0x4, scoped, tag = 'scoped memory for apply.1']
    #allocation4 [shape = 'u8[65536]{0}', space=vmem, size = 0x10000, scoped, tag = 'input window, operand 3, single buffered']
    #allocation5 [shape = 's32[1]{0}', space=sflag, size = 0x4, scoped, tag = 'scoped memory for apply.1']
    %12 = vsyncpa [#allocation3], 0
    %13 = vsyncpa [#allocation5], 0
    // Predicated region
    $region2: #{apply.1} parent=1 // pred_check
      _
    $region3: #{apply.1} parent=1 // pred_check_branch
      %15 = sbr.rel (0) target = $region5
    $region4: #{apply.1} parent=1 // pred_region
      _
    $region5: #{apply.1} parent=1 // pred_fallthru
      _
    // Predicated region
    $region6: #{apply.1} parent=1 // pred_check
      _
    $region7: #{apply.1} parent=1 // pred_check_branch
      %17 = sbr.rel (0) target = $region9
    $region8: #{apply.1} parent=1 // pred_region
      _
    $region9: #{apply.1} parent=1 // pred_fallthru
      _
    // Predicated region
    $region10: #{apply.1} parent=1 // pred_check
      _
    $region11: #{apply.1} parent=1 // pred_check_branch
      %19 = sbr.rel (0) target = $region13
    $region12: #{apply.1} parent=1 // pred_region
      %21 = vsyncadd [#allocation3], 0
      %s22 = sshll.u32 %s2, 4
      %s23 = int_to_ptr.hbm [resolvable:$true] %s22
      %s24 = sshll.u32 [#allocation2], 4
      %s25 = int_to_ptr.vmem [resolvable:$true] %s24
      %30 = dma.hbm_to_vmem [thread:$0]  %s23, 2048, %s25, [#allocation3], 128, 128, 8
    $region13: #{apply.1} parent=1 // pred_fallthru
      _
    // Predicated region
    $region14: #{apply.1} parent=1 // pred_check
      _
    $region15: #{apply.1} parent=1 // pred_check_branch
      %32 = sbr.rel (0) target = $region17
    $region16: #{apply.1} parent=1 // pred_region
      %34 = vsyncadd [#allocation5], 0
      %s35 = sshll.u32 %s3, 4
      %s36 = int_to_ptr.hbm [resolvable:$true] %s35
      %s37 = sshll.u32 [#allocation4], 4
      %s38 = int_to_ptr.vmem [resolvable:$true] %s37
      %43 = dma.hbm_to_vmem [thread:$0]  %s36, 2048, %s38, [#allocation5], 128, 128, 8
    $region17: #{apply.1} parent=1 // pred_fallthru
      _
    // Predicated region
    $region18: #{apply.1} parent=1 // pred_check
      _
    $region19: #{apply.1} parent=1 // pred_check_branch
      %45 = sbr.rel (0) target = $region21
    $region20: #{apply.1} parent=1 // pred_region
      _
    $region21: #{apply.1} parent=1 // pred_fallthru
      _
    // Predicated region
    $region22: #{apply.1} parent=1 // pred_check
      _
    $region23: #{apply.1} parent=1 // pred_check_branch
      %47 = sbr.rel (0) target = $region25
    $region24: #{apply.1} parent=1 // pred_region
      _
    $region25: #{apply.1} parent=1 // pred_fallthru
      _
    // Predicated region
    $region26: #{apply.1} parent=1 // pred_check
      _
    $region27: #{apply.1} parent=1 // pred_check_branch
      %49 = sbr.rel (0) target = $region29
    $region28: #{apply.1} parent=1 // pred_region
      _
    $region29: #{apply.1} parent=1 // pred_fallthru
      _
    // Predicated region
    $region30: #{apply.1} parent=1 // pred_check
      _
    $region31: #{apply.1} parent=1 // pred_check_branch
      %51 = sbr.rel (0) target = $region33
    $region32: #{apply.1} parent=1 // pred_region
      %53 = dma.done [#allocation3], 2048
    $region33: #{apply.1} parent=1 // pred_fallthru
      _
    // Predicated region
    $region34: #{apply.1} parent=1 // pred_check
      _
    $region35: #{apply.1} parent=1 // pred_check_branch
      %55 = sbr.rel (0) target = $region37
    $region36: #{apply.1} parent=1 // pred_region
      %57 = dma.done [#allocation5], 2048
    $region37: #{apply.1} parent=1 // pred_fallthru
      _
    %v58 = vld [vmem:[%s0] sm:$0xff]
    %v59 = vld [vmem:[%s0 + $0x8] sm:$0xff]
    %v60 = vlaneseq
    %v61 = vshrl.u32 %v60, 7
    %v62 = vadd.s32 %v61, 8
    %vm63 = vcmp.eq.s32.totalorder %v61, 0
    %vm64 = vcmp.eq.s32.totalorder %v62, 0
    %v65 = vrot.slane %v58, 7
    %v66 = vrot.slane %v59, 7
    %vm67 = vcmp.lt.s32.totalorder %v61, 1
    %v68 = vsel %vm67, %v65, %v66
    %v69 = vsel %vm67, %v66, %v65
    %v70 = vsel %vm63, 1, 0
    %v71 = vsel %vm64, 1, 0
    %vm72 = vcmp.eq.s32.totalorder %v70, 1
    %vm73 = vcmp.eq.s32.totalorder %v71, 1
    %v74 = vsel %vm72, 0.0, %v69
    %v75 = vsel %vm73, 0.0, %v68
    %vm76 = vcmp.eq.s32.totalorder %v61, 15
    %vm77 = vcmp.eq.s32.totalorder %v62, 15
    %v78 = vrot.slane %v58, 1
    %v79 = vrot.slane %v59, 1
    %vm80 = vcmp.lt.s32.totalorder %v61, 7
    %v81 = vsel %vm80, %v78, %v79
    %v82 = vsel %vm80, %v79, %v78
    %v83 = vsel %vm76, 1, 0
    %v84 = vsel %vm77, 1, 0
    %vm85 = vcmp.eq.s32.totalorder %v83, 1
    %vm86 = vcmp.eq.s32.totalorder %v84, 1
    %v87 = vsel %vm85, 0.0, %v81
    %v88 = vsel %vm86, 0.0, %v82
    %v89 = vld [vmem:[%s1] sm:$0xff]
    %v90 = vld [vmem:[%s1 + $0x8] sm:$0xff]
    %v91 = vld [vmem:[%s1 + $0x10] sm:$0xff]
    %v92 = vld [vmem:[%s1 + $0x18] sm:$0xff]
    %v93 = vld [vmem:[%s1 + $0x20] sm:$0xff]
    %v94 = vld [vmem:[%s1 + $0x28] sm:$0xff]
    %v95 = vld [vmem:[%s1 + $0x30] sm:$0xff]
    %v96 = vld [vmem:[%s1 + $0x38] sm:$0xff]
    %v97 = vld [vmem:[%s1 + $0x40] sm:$0xff]
    %v98 = vld [vmem:[%s1 + $0x48] sm:$0xff]
    %v99 = vld [vmem:[%s1 + $0x50] sm:$0xff]
    %v100 = vld [vmem:[%s1 + $0x58] sm:$0xff]
    %v101 = vld [vmem:[%s1 + $0x60] sm:$0xff]
    %v102 = vld [vmem:[%s1 + $0x68] sm:$0xff]
    %v103 = vld [vmem:[%s1 + $0x70] sm:$0xff]
    %v104 = vld [vmem:[%s1 + $0x78] sm:$0xff]
    %s105 = scalar_lea.vmem %s1, 128
    %v106 = vld [vmem:[%s105] sm:$0xff]
    %v107 = vld [vmem:[%s105 + $0x8] sm:$0xff]
    %v108 = vld [vmem:[%s105 + $0x10] sm:$0xff]
    %v109 = vld [vmem:[%s105 + $0x18] sm:$0xff]
    %v110 = vld [vmem:[%s105 + $0x20] sm:$0xff]
    %v111 = vld [vmem:[%s105 + $0x28] sm:$0xff]
    %v112 = vld [vmem:[%s105 + $0x30] sm:$0xff]
    %v113 = vld [vmem:[%s105 + $0x38] sm:$0xff]
    %v114 = vld [vmem:[%s105 + $0x40] sm:$0xff]
    %v115 = vld [vmem:[%s105 + $0x48] sm:$0xff]
    %v116 = vld [vmem:[%s105 + $0x50] sm:$0xff]
    %v117 = vld [vmem:[%s105 + $0x58] sm:$0xff]
    %v118 = vld [vmem:[%s105 + $0x60] sm:$0xff]
    %v119 = vld [vmem:[%s105 + $0x68] sm:$0xff]
    %v120 = vld [vmem:[%s105 + $0x70] sm:$0xff]
    %v121 = vld [vmem:[%s105 + $0x78] sm:$0xff]
    %122 = vmatpush.msra.mxu0 %v121
    %123 = vmatpush.msra.mxu0 %v120
    %124 = vmatpush.msra.mxu0 %v119
    %125 = vmatpush.msra.mxu0 %v118
    %126 = vmatpush.msra.mxu0 %v117
    %127 = vmatpush.msra.mxu0 %v116
    %128 = vmatpush.msra.mxu0 %v115
    %129 = vmatpush.msra.mxu0 %v114
    %130 = vmatpush.msra.mxu0 %v113
    %131 = vmatpush.msra.mxu0 %v112
    %132 = vmatpush.msra.mxu0 %v111
    %133 = vmatpush.msra.mxu0 %v110
    %134 = vmatpush.msra.mxu0 %v109
    %135 = vmatpush.msra.mxu0 %v108
    %136 = vmatpush.msra.mxu0 %v107
    %137 = vmatpush.msra.mxu0 %v106
    %138 = vmatmul.f32.gmra.mxu0 %v58
    %v139 = vpop.f32.mrf.mxu0
    %v140 = vadd.f32 0.0, %v139
    %141 = vmatmul.f32.gmra.mxu0 %v59
    %v142 = vpop.f32.mrf.mxu0
    %v143 = vadd.f32 0.0, %v142
    %144 = vdwg.mxu0
    %145 = vmatpush.msra.mxu0 %v104
    %146 = vmatpush.msra.mxu0 %v103
    %147 = vmatpush.msra.mxu0 %v102
    %148 = vmatpush.msra.mxu0 %v101
    %149 = vmatpush.msra.mxu0 %v100
    %150 = vmatpush.msra.mxu0 %v99
    %151 = vmatpush.msra.mxu0 %v98
    %152 = vmatpush.msra.mxu0 %v97
    %153 = vmatpush.msra.mxu0 %v96
    %154 = vmatpush.msra.mxu0 %v95
    %155 = vmatpush.msra.mxu0 %v94
    %156 = vmatpush.msra.mxu0 %v93
    %157 = vmatpush.msra.mxu0 %v92
    %158 = vmatpush.msra.mxu0 %v91
    %159 = vmatpush.msra.mxu0 %v90
    %160 = vmatpush.msra.mxu0 %v89
    %161 = vmatmul.f32.gmra.mxu0 %v74
    %v162 = vpop.f32.mrf.mxu0
    %v163 = vadd.f32 %v140, %v162
    %164 = vmatmul.f32.gmra.mxu0 %v75
    %v165 = vpop.f32.mrf.mxu0
    %v166 = vadd.f32 %v143, %v165
    %167 = vdwg.mxu0
    %s168 = scalar_lea.vmem %s1, 256
    %v169 = vld [vmem:[%s168] sm:$0xff]
    %v170 = vld [vmem:[%s168 + $0x8] sm:$0xff]
    %v171 = vld [vmem:[%s168 + $0x10] sm:$0xff]
    %v172 = vld [vmem:[%s168 + $0x18] sm:$0xff]
    %v173 = vld [vmem:[%s168 + $0x20] sm:$0xff]
    %v174 = vld [vmem:[%s168 + $0x28] sm:$0xff]
    %v175 = vld [vmem:[%s168 + $0x30] sm:$0xff]
    %v176 = vld [vmem:[%s168 + $0x38] sm:$0xff]
    %v177 = vld [vmem:[%s168 + $0x40] sm:$0xff]
    %v178 = vld [vmem:[%s168 + $0x48] sm:$0xff]
    %v179 = vld [vmem:[%s168 + $0x50] sm:$0xff]
    %v180 = vld [vmem:[%s168 + $0x58] sm:$0xff]
    %v181 = vld [vmem:[%s168 + $0x60] sm:$0xff]
    %v182 = vld [vmem:[%s168 + $0x68] sm:$0xff]
    %v183 = vld [vmem:[%s168 + $0x70] sm:$0xff]
    %v184 = vld [vmem:[%s168 + $0x78] sm:$0xff]
    %185 = vmatpush.msra.mxu0 %v184
    %186 = vmatpush.msra.mxu0 %v183
    %187 = vmatpush.msra.mxu0 %v182
    %188 = vmatpush.msra.mxu0 %v181
    %189 = vmatpush.msra.mxu0 %v180
    %190 = vmatpush.msra.mxu0 %v179
    %191 = vmatpush.msra.mxu0 %v178
    %192 = vmatpush.msra.mxu0 %v177
    %193 = vmatpush.msra.mxu0 %v176
    %194 = vmatpush.msra.mxu0 %v175
    %195 = vmatpush.msra.mxu0 %v174
    %196 = vmatpush.msra.mxu0 %v173
    %197 = vmatpush.msra.mxu0 %v172
    %198 = vmatpush.msra.mxu0 %v171
    %199 = vmatpush.msra.mxu0 %v170
    %200 = vmatpush.msra.mxu0 %v169
    %201 = vmatmul.f32.gmra.mxu0 %v87
    %v202 = vpop.f32.mrf.mxu0
    %v203 = vadd.f32 0.0, %v202
    %204 = vmatmul.f32.gmra.mxu0 %v88
    %v205 = vpop.f32.mrf.mxu0
    %v206 = vadd.f32 0.0, %v205
    %207 = vdwg.mxu0
    %v208 = vadd.f32 %v163, %v203
    %v209 = vadd.f32 %v166, %v206
    %v210 = vld [vmem:[%s5] sm:$0x1]
    %v211 = vld [vmem:[%s6] sm:$0x1]
    %v212 = vadd.f32 %v208, %v209
    %v213 = vrot.slane %v212, 4
    %v214 = vadd.f32 %v212, %v213
    %v215 = vrot.slane %v214, 2
    %v216 = vadd.f32 %v214, %v215
    %v217 = vrot.slane %v216, 1
    %v218 = vadd.f32 %v216, %v217
    %v219 = vld [vmem:[#allocation2] sm:$0xff]
    %v220 = vld [vmem:[#allocation2 + $0x8] sm:$0xff]
    %v221 = vld [vmem:[#allocation2 + $0x10] sm:$0xff]
    %v222 = vld [vmem:[#allocation2 + $0x18] sm:$0xff]
    %v223 = vld [vmem:[#allocation2 + $0x20] sm:$0xff]
    %v224 = vld [vmem:[#allocation2 + $0x28] sm:$0xff]
    %v225 = vld [vmem:[#allocation2 + $0x30] sm:$0xff]
    %v226 = vld [vmem:[#allocation2 + $0x38] sm:$0xff]
    %v227 = vld [vmem:[#allocation2 + $0x40] sm:$0xff]
    %v228 = vld [vmem:[#allocation2 + $0x48] sm:$0xff]
    %v229 = vld [vmem:[#allocation2 + $0x50] sm:$0xff]
    %v230 = vld [vmem:[#allocation2 + $0x58] sm:$0xff]
    %v231 = vld [vmem:[#allocation2 + $0x60] sm:$0xff]
    %v232 = vld [vmem:[#allocation2 + $0x68] sm:$0xff]
    %v233 = vld [vmem:[#allocation2 + $0x70] sm:$0xff]
    %v234 = vld [vmem:[#allocation2 + $0x78] sm:$0xff]
    %235 = vmatpush.msra.mxu0 %v234
    %236 = vmatpush.msra.mxu0 %v233
    %237 = vmatpush.msra.mxu0 %v232
    %238 = vmatpush.msra.mxu0 %v231
    %239 = vmatpush.msra.mxu0 %v230
    %240 = vmatpush.msra.mxu0 %v229
    %241 = vmatpush.msra.mxu0 %v228
    %242 = vmatpush.msra.mxu0 %v227
    %243 = vmatpush.msra.mxu0 %v226
    %244 = vmatpush.msra.mxu0 %v225
    %245 = vmatpush.msra.mxu0 %v224
    %246 = vmatpush.msra.mxu0 %v223
    %247 = vmatpush.msra.mxu0 %v222
    %248 = vmatpush.msra.mxu0 %v221
    %249 = vmatpush.msra.mxu0 %v220
    %250 = vmatpush.msra.mxu0 %v219
    %251 = vmatmul.f32.gmra.mxu0 %v218
    %v252 = vpop.f32.mrf.mxu0
    %v253 = vadd.f32 0.0, %v252
    %254 = vdwg.mxu0
    %v255 = vperm.slane %v253, 0
    %v256 = vsub.f32 %v208, %v255
    %v257 = vsub.f32 %v209, %v255
    %v258 = vmul.f32 %v256, %v256
    %v259 = vmul.f32 %v257, %v257
    %v260 = vadd.f32 %v258, %v259
    %v261 = vrot.slane %v260, 4
    %v262 = vadd.f32 %v260, %v261
    %v263 = vrot.slane %v262, 2
    %v264 = vadd.f32 %v262, %v263
    %v265 = vrot.slane %v264, 1
    %v266 = vadd.f32 %v264, %v265
    %v267 = vld [vmem:[#allocation4] sm:$0xff]
    %v268 = vld [vmem:[#allocation4 + $0x8] sm:$0xff]
    %v269 = vld [vmem:[#allocation4 + $0x10] sm:$0xff]
    %v270 = vld [vmem:[#allocation4 + $0x18] sm:$0xff]
    %v271 = vld [vmem:[#allocation4 + $0x20] sm:$0xff]
    %v272 = vld [vmem:[#allocation4 + $0x28] sm:$0xff]
    %v273 = vld [vmem:[#allocation4 + $0x30] sm:$0xff]
    %v274 = vld [vmem:[#allocation4 + $0x38] sm:$0xff]
    %v275 = vld [vmem:[#allocation4 + $0x40] sm:$0xff]
    %v276 = vld [vmem:[#allocation4 + $0x48] sm:$0xff]
    %v277 = vld [vmem:[#allocation4 + $0x50] sm:$0xff]
    %v278 = vld [vmem:[#allocation4 + $0x58] sm:$0xff]
    %v279 = vld [vmem:[#allocation4 + $0x60] sm:$0xff]
    %v280 = vld [vmem:[#allocation4 + $0x68] sm:$0xff]
    %v281 = vld [vmem:[#allocation4 + $0x70] sm:$0xff]
    %v282 = vld [vmem:[#allocation4 + $0x78] sm:$0xff]
    %283 = vmatpush.msra.mxu0 %v282
    %284 = vmatpush.msra.mxu0 %v281
    %285 = vmatpush.msra.mxu0 %v280
    %286 = vmatpush.msra.mxu0 %v279
    %287 = vmatpush.msra.mxu0 %v278
    %288 = vmatpush.msra.mxu0 %v277
    %289 = vmatpush.msra.mxu0 %v276
    %290 = vmatpush.msra.mxu0 %v275
    %291 = vmatpush.msra.mxu0 %v274
    %292 = vmatpush.msra.mxu0 %v273
    %293 = vmatpush.msra.mxu0 %v272
    %294 = vmatpush.msra.mxu0 %v271
    %295 = vmatpush.msra.mxu0 %v270
    %296 = vmatpush.msra.mxu0 %v269
    %297 = vmatpush.msra.mxu0 %v268
    %298 = vmatpush.msra.mxu0 %v267
    %299 = vmatmul.f32.gmra.mxu0 %v266
    %v300 = vpop.f32.mrf.mxu0
    %v301 = vadd.f32 0.0, %v300
    %302 = vdwg.mxu0
    %v303 = vmax.f32 %v301, 0.0
    %v304 = vadd.f32 %v303, 1e-05
    %v305 = vrsqrt.pop %v304
    %v306 = vmul.f32 %v305, %v304
    %v307 = vmul.f32 %v306, %v305
    %v308 = vmul.f32 0.5, %v307
    %v309 = vsub.f32 1.5, %v308
    %v310 = vmul.f32 %v305, %v309
    %vm311 = vweird.f32 %v304
    %vm312 = vweird.f32 %v305
    %vm313 = vmor %vm311, %vm312
    %v314 = vsel %vm313, %v305, %v310
    %v315 = vld [vmem:[%s4] sm:$0xff]
    %vm316 = vcmask 64512
    %v318 = vsel %vm316, %v314, 0
    %320 = vmatpush.msra.mxu0 0.0
    %321 = vmatpush.msra.mxu0 0.0
    %322 = vmatpush.msra.mxu0 0.0
    %323 = vmatpush.msra.mxu0 0.0
    %324 = vmatpush.msra.mxu0 0.0
    %325 = vmatpush.msra.mxu0 0.0
    %326 = vmatpush.msra.mxu0 0.0
    %327 = vmatpush.msra.mxu0 0.0
    %328 = vmatpush.msra.mxu0 0.0
    %329 = vmatpush.msra.mxu0 0.0
    %330 = vmatpush.msra.mxu0 0.0
    %331 = vmatpush.msra.mxu0 0.0
    %332 = vmatpush.msra.mxu0 0.0
    %333 = vmatpush.msra.mxu0 0.0
    %334 = vmatpush.msra.mxu0 0.0
    %335 = vmatpush.msra.mxu0 %v315
    %336 = vmatmul.f32.gmra.mxu0 %v318
    %v337 = vpop.f32.mrf.mxu0
    %v338 = vadd.f32 0.0, %v337
    %339 = vdwg.mxu0
    %v340 = vmul.f32 %v338, %v210
    %v341 = vperm.slane %v340, 0
    %v342 = vmul.f32 %v256, %v341
    %v343 = vmul.f32 %v257, %v341
    %v345 = vperm.slane %v211, 0
    %v347 = vadd.f32 %v342, %v345
    %v348 = vadd.f32 %v343, %v345
    %349 = vst [vmem:[%s7] sm:$0xff] %v347
    %350 = vst [vmem:[%s7 + $0x8] sm:$0xff] %v348
    // Predicated region
    $region38: #{apply.1} parent=1 // pred_check
      _
    $region39: #{apply.1} parent=1 // pred_check_branch
      %352 = sbr.rel (0) target = $region41
    $region40: #{apply.1} parent=1 // pred_region
      _
    $region41: #{apply.1} parent=1 // pred_fallthru
      _
    // Predicated region
    $region42: #{apply.1} parent=1 // pred_check
      _
    $region43: #{apply.1} parent=1 // pred_check_branch
      %354 = sbr.rel (0) target = $region45
    $region44: #{apply.1} parent=1 // pred_region
      _
    $region45: #{apply.1} parent=1 // pred_fallthru
      _
    %355 = vsyncpa [#allocation3], 1
    %356 = vsyncpa [#allocation5], 1

</llo_original>
